<compile_context>
chip_gen: v5e
topology: v5e:2x2
jax: 0.10.0
libtpu: 0.0.40
codegen_flags: <defaults>
</compile_context>

<pallas_src>
import jax
import jax.numpy as jnp
import numpy as np
from jax.experimental import pallas as pl
from jax.experimental.pallas import tpu as pltpu


LANE = 1024        # lane-axis width per row (multiple of 128)
MAX_ROWS = 256     # sublane rows per grid step (multiple of 8); 2*256*1024*4B = 2 MB in/step


def _round_up(n, m):
    return ((n + m - 1) // m) * m


def xor_mlp_kernel(params_ref, x_ref, o_ref):
    """One batch tile of the XOR MLP.

    params_ref : SMEM f32[9] = [w00, w01, w10, w11, b0, b1, v0, v1, c]
                 (w1 stored (in, out), w2 stored (in, out), biases appended)
    x_ref      : VMEM f32[2, tR, L]   dim0 = input feature, (tR, L) = dense batch slab
    o_ref      : VMEM f32[tR, L]
    """
    x0 = x_ref[0]                        # (tR, L) fully dense vregs
    x1 = x_ref[1]

    w00 = params_ref[0]
    w01 = params_ref[1]
    w10 = params_ref[2]
    w11 = params_ref[3]
    b0 = params_ref[4]
    b1 = params_ref[5]
    v0 = params_ref[6]
    v1 = params_ref[7]
    c = params_ref[8]

    # Linear(2, 2) + ReLU — pure VPU broadcast FMAs on dense (tR, L) slabs.
    h0 = jnp.maximum(x0 * w00 + x1 * w10 + b0, 0.0)
    h1 = jnp.maximum(x0 * w01 + x1 * w11 + b1, 0.0)

    # Linear(2, 1) + Sigmoid.  sigmoid(z) = 0.5*tanh(0.5*z) + 0.5: one EUP op.
    z = h0 * v0 + h1 * v1 + c
    o_ref[...] = 0.5 * jnp.tanh(0.5 * z) + 0.5


def xor_forward(x, w1, b1, w2, b2, *, lane=LANE, max_rows=MAX_ROWS):
    """Forward pass of XORNets: sigmoid(relu(x @ w1 + b1) @ w2 + b2).

    x : (B, 2)   w1 : (2, 2) (= W1.T)   b1 : (2,)   w2 : (2, 1) (= W2.T)   b2 : (1,)
    Returns (B, 1) float32, matching the PyTorch module's output.
    """
    B = x.shape[0]
    L = lane
    rows_needed = pl.cdiv(B, L)                    # total rows of length L
    tR = min(max_rows, _round_up(rows_needed, 8))  # sublane-dense row tile
    n_blocks = pl.cdiv(rows_needed, tR)
    R = n_blocks * tR
    Bp = R * L

    # Batch -> dense (2, R, L) slab.  transpose + pad (no zeros+scatter pass);
    # the reshape is a free view.
    xt = x.astype(jnp.float32).T                   # (2, B)
    xt = jnp.pad(xt, ((0, 0), (0, Bp - B))).reshape(2, R, L)

    # All 9 parameters as one flat SMEM scalar vector (no per-weight DMAs).
    params = jnp.concatenate(
        [w1.reshape(-1), b1.reshape(-1), w2.reshape(-1), b2.reshape(-1)]
    ).astype(jnp.float32)

    out = pl.pallas_call(
        xor_mlp_kernel,
        out_shape=jax.ShapeDtypeStruct((R, L), jnp.float32),
        grid=(n_blocks,),
        in_specs=[
            pl.BlockSpec(memory_space=pltpu.MemorySpace.SMEM),      # params (whole array)
            pl.BlockSpec((2, tR, L), lambda i: (0, i, 0)),          # dense x tile
        ],
        out_specs=pl.BlockSpec((tR, L), lambda i: (i, 0)),          # dense out tile
        compiler_params=pltpu.CompilerParams(
            dimension_semantics=("parallel",),   # shard batch blocks across TCs (v7x)
        ),
        cost_estimate=pl.CostEstimate(
            flops=16 * Bp, transcendentals=Bp, bytes_accessed=12 * Bp
        ),
    )(params, xt)

    # Un-pad and restore (B, 1) batch-major layout.
    return out.reshape(-1)[:B].reshape(B, 1)


if __name__ == "__main__":
    key = jax.random.PRNGKey(0)
    k1, k2, k3 = jax.random.split(key, 3)

    # PyTorch weights_init: nn.Linear weights ~ N(0, 1), biases zero.
    # W1 is (out=2, in=2), W2 is (out=1, in=2); store transposed (in, out).
    W1 = jax.random.normal(k1, (2, 2), dtype=jnp.float32)
    W2 = jax.random.normal(k2, (1, 2), dtype=jnp.float32)
    w1 = W1.T                                    # (2, 2)
    w2 = W2.T                                    # (2, 1)
    b1 = jnp.zeros((2,), jnp.float32)
    b2 = jnp.zeros((1,), jnp.float32)

    def ref_forward(xin):
        return jax.nn.sigmoid(jnp.maximum(xin @ w1 + b1, 0.0) @ w2 + b2)

    # 1) The XOR inputs from the PyTorch script (B = 4, padded to one small dense tile).
    x_xor = jnp.asarray(np.array([[0, 0], [0, 1], [1, 0], [1, 1]], dtype=np.float32))
    out = xor_forward(x_xor, w1, b1, w2, b2)
    jax.block_until_ready(out)
    assert out.shape == (4, 1)
    np.testing.assert_allclose(
        np.asarray(out), np.asarray(ref_forward(x_xor)), rtol=5e-3, atol=5e-3
    )

    # 2) A larger batch on the default (big-tile) path.
    x_big = jax.random.uniform(k3, (2048, 2), dtype=jnp.float32)
    out_big = xor_forward(x_big, w1, b1, w2, b2)
    jax.block_until_ready(out_big)
    np.testing.assert_allclose(
        np.asarray(out_big), np.asarray(ref_forward(x_big)), rtol=5e-3, atol=5e-3
    )

    # 3) Same batch with small tiles to exercise the multi-block, pipelined,
    #    "parallel"-grid path (2 blocks of (8, 128) rows x lanes).
    out_multi = xor_forward(x_big, w1, b1, w2, b2, lane=128, max_rows=8)
    jax.block_until_ready(out_multi)
    np.testing.assert_allclose(
        np.asarray(out_multi), np.asarray(ref_forward(x_big)), rtol=5e-3, atol=5e-3
    )

    print("KERNEL_OK")
</pallas_src>

<mosaic_0001>
module attributes {stable_mosaic.version = 11 : i64} {
  func.func @xor_mlp_kernel(%arg0: i32, %arg1: memref<9xf32, #tpu.memory_space<smem>>, %arg2: memref<2x8x1024xf32, #tpu.memory_space<vmem>>, %arg3: memref<8x1024xf32, #tpu.memory_space<vmem>>) attributes {dimension_semantics = [#tpu.dimension_semantics<parallel>], iteration_bounds = array<i64: 1>, scalar_prefetch = 0 : i64, scratch_operands = 0 : i64, tpu.core_type = #tpu.core_type<tc>, window_params = [{transform_indices = @transform_0, window_bounds = array<i64: 9>}, {transform_indices = @transform_1, window_bounds = array<i64: 2, 8, 1024>}, {transform_indices = @transform_2, window_bounds = array<i64: 8, 1024>}]} {
    %c0 = arith.constant 0 : index
    %c0_0 = arith.constant 0 : index
    %c0_1 = arith.constant 0 : index
    %0 = vector.load %arg2[%c0, %c0_0, %c0_1] : memref<2x8x1024xf32, #tpu.memory_space<vmem>>, vector<1x8x1024xf32>
    %1 = vector.shape_cast %0 : vector<1x8x1024xf32> to vector<8x1024xf32>
    %c1 = arith.constant 1 : index
    %c0_2 = arith.constant 0 : index
    %c0_3 = arith.constant 0 : index
    %2 = vector.load %arg2[%c1, %c0_2, %c0_3] : memref<2x8x1024xf32, #tpu.memory_space<vmem>>, vector<1x8x1024xf32>
    %3 = vector.shape_cast %2 : vector<1x8x1024xf32> to vector<8x1024xf32>
    %c0_4 = arith.constant 0 : index
    %4 = memref.load %arg1[%c0_4] : memref<9xf32, #tpu.memory_space<smem>>
    %c1_5 = arith.constant 1 : index
    %5 = memref.load %arg1[%c1_5] : memref<9xf32, #tpu.memory_space<smem>>
    %c2 = arith.constant 2 : index
    %6 = memref.load %arg1[%c2] : memref<9xf32, #tpu.memory_space<smem>>
    %c3 = arith.constant 3 : index
    %7 = memref.load %arg1[%c3] : memref<9xf32, #tpu.memory_space<smem>>
    %c4 = arith.constant 4 : index
    %8 = memref.load %arg1[%c4] : memref<9xf32, #tpu.memory_space<smem>>
    %c5 = arith.constant 5 : index
    %9 = memref.load %arg1[%c5] : memref<9xf32, #tpu.memory_space<smem>>
    %c6 = arith.constant 6 : index
    %10 = memref.load %arg1[%c6] : memref<9xf32, #tpu.memory_space<smem>>
    %c7 = arith.constant 7 : index
    %11 = memref.load %arg1[%c7] : memref<9xf32, #tpu.memory_space<smem>>
    %c8 = arith.constant 8 : index
    %12 = memref.load %arg1[%c8] : memref<9xf32, #tpu.memory_space<smem>>
    %13 = vector.broadcast %4 : f32 to vector<8x1024xf32>
    %14 = arith.mulf %1, %13 : vector<8x1024xf32>
    %15 = vector.broadcast %6 : f32 to vector<8x1024xf32>
    %16 = arith.mulf %3, %15 : vector<8x1024xf32>
    %17 = arith.addf %14, %16 : vector<8x1024xf32>
    %18 = vector.broadcast %8 : f32 to vector<8x1024xf32>
    %19 = arith.addf %17, %18 : vector<8x1024xf32>
    %cst = arith.constant 0.000000e+00 : f32
    %20 = vector.broadcast %cst : f32 to vector<8x1024xf32>
    %21 = arith.maximumf %19, %20 : vector<8x1024xf32>
    %22 = vector.broadcast %5 : f32 to vector<8x1024xf32>
    %23 = arith.mulf %1, %22 : vector<8x1024xf32>
    %24 = vector.broadcast %7 : f32 to vector<8x1024xf32>
    %25 = arith.mulf %3, %24 : vector<8x1024xf32>
    %26 = arith.addf %23, %25 : vector<8x1024xf32>
    %27 = vector.broadcast %9 : f32 to vector<8x1024xf32>
    %28 = arith.addf %26, %27 : vector<8x1024xf32>
    %cst_6 = arith.constant 0.000000e+00 : f32
    %29 = vector.broadcast %cst_6 : f32 to vector<8x1024xf32>
    %30 = arith.maximumf %28, %29 : vector<8x1024xf32>
    %31 = vector.broadcast %10 : f32 to vector<8x1024xf32>
    %32 = arith.mulf %21, %31 : vector<8x1024xf32>
    %33 = vector.broadcast %11 : f32 to vector<8x1024xf32>
    %34 = arith.mulf %30, %33 : vector<8x1024xf32>
    %35 = arith.addf %32, %34 : vector<8x1024xf32>
    %36 = vector.broadcast %12 : f32 to vector<8x1024xf32>
    %37 = arith.addf %35, %36 : vector<8x1024xf32>
    %cst_7 = arith.constant 5.000000e-01 : f32
    %38 = vector.broadcast %cst_7 : f32 to vector<8x1024xf32>
    %39 = arith.mulf %38, %37 : vector<8x1024xf32>
    %40 = math.tanh %39 : vector<8x1024xf32>
    %cst_8 = arith.constant 5.000000e-01 : f32
    %41 = vector.broadcast %cst_8 : f32 to vector<8x1024xf32>
    %42 = arith.mulf %41, %40 : vector<8x1024xf32>
    %cst_9 = arith.constant 5.000000e-01 : f32
    %43 = vector.broadcast %cst_9 : f32 to vector<8x1024xf32>
    %44 = arith.addf %42, %43 : vector<8x1024xf32>
    %c0_10 = arith.constant 0 : index
    %c0_11 = arith.constant 0 : index
    %45 = vector.load %arg3[%c0_10, %c0_11] : memref<8x1024xf32, #tpu.memory_space<vmem>>, vector<8x1024xf32>
    tpu.vector_store %arg3[%c0_10, %c0_11], %44 {strides = array<i32>} : memref<8x1024xf32, #tpu.memory_space<vmem>>, vector<8x1024xf32>,
    return
  }
  func.func @transform_0(%arg0: i32) -> i32 {
    %c0_i32 = arith.constant 0 : i32
    %c0_i32_0 = arith.constant 0 : i32
    return %c0_i32 : i32
  }
  func.func @transform_1(%arg0: i32) -> (i32, i32, i32) {
    %c0_i32 = arith.constant 0 : i32
    %c0_i32_0 = arith.constant 0 : i32
    %c0_i32_1 = arith.constant 0 : i32
    return %c0_i32, %arg0, %c0_i32_0 : i32, i32, i32
  }
  func.func @transform_2(%arg0: i32) -> (i32, i32) {
    %c0_i32 = arith.constant 0 : i32
    %c0_i32_0 = arith.constant 0 : i32
    return %arg0, %c0_i32 : i32, i32
  }
}

</mosaic_0001>

<llo_original>
// kernel: tpu_custom_call.1
$region0: #{tpu_custom_call.1}
  #allocation0 [shape = 'u32[]', space=smem, size = 0x4, offset = 0x4, fixed_abs, tag = 'smem constant byte address 0x4 - core index']
  #allocation1 [shape = 'u32[72,128]{1,0:T(1,128)}', space=vmem, size = 0x9000, scoped, tag = 'internal scratch']
  %s0 = inlined_call_operand.hbm [shape: f32[9], index: 0, kind: input, shape index: {}]
  %s1 = inlined_call_operand.hbm [shape: f32[2,8,1024], index: 1, kind: input, shape index: {}]
  %s2 = inlined_call_operand.hbm [shape: f32[8,1024], index: 2, kind: output, shape index: {}]
  %s3 = sld [smem:[#allocation0]]
  $region26: #{tpu_custom_call.1} parent=0
    _
  %s5 = ssub.s32 1, %s3
  %s6 = scalar_select 0, %s5, %s3
  $region1: #{tpu_custom_call.1} parent=0
    #allocation2 [shape = 'u8[512]{0}', space=smem, size = 0x200, scoped, tag = 'input window, operand 0, single buffered']
    #allocation3 [shape = 's32[1]{0}', space=sflag, size = 0x4, scoped, tag = 'scoped memory for tpu_custom_call.1']
    #allocation4 [shape = 's32[1]{0}', space=sflag, size = 0x4, scoped, tag = 'scoped memory for tpu_custom_call.1']
    #allocation5 [shape = 's32[1]{0}', space=sflag, size = 0x4, scoped, tag = 'scoped memory for tpu_custom_call.1']
    #allocation6 [shape = 'u8[65536]{0}', space=vmem, size = 0x10000, scoped, tag = 'input window, operand 1, single buffered']
    #allocation7 [shape = 'u8[32768]{0}', space=vmem, size = 0x8000, scoped, tag = 'output window, operand 0, single buffered']
    %7 = vsyncpa [#allocation5], 0
    %8 = vsyncpa [#allocation3], 0
    %9 = vsyncpa [#allocation4], 0
    // Predicated region
    $region2: #{tpu_custom_call.1} parent=1 // pred_check
      _
    $region3: #{tpu_custom_call.1} parent=1 // pred_check_branch
      %11 = sbr.rel (0) target = $region5
    $region4: #{tpu_custom_call.1} parent=1 // pred_region
      %13 = vsyncadd [#allocation5], 0
      %s15 = sshll.u32 %s0, 4
      %s16 = int_to_ptr.hbm [resolvable:$true] %s15
      %18 = dma.hbm_to_smem %s16, 16, [#allocation2], [#allocation5]
    $region5: #{tpu_custom_call.1} parent=1 // pred_fallthru
      _
    // Predicated region
    $region6: #{tpu_custom_call.1} parent=1 // pred_check
      _
    $region7: #{tpu_custom_call.1} parent=1 // pred_check_branch
      %20 = sbr.rel (0) target = $region9
    $region8: #{tpu_custom_call.1} parent=1 // pred_region
      %22 = vsyncadd [#allocation3], 0
      %s23 = sshll.u32 %s1, 4
      %s24 = int_to_ptr.hbm [resolvable:$true] %s23
      %s25 = sshll.u32 [#allocation6], 4
      %s26 = int_to_ptr.vmem [resolvable:$true] %s25
      %31 = dma.hbm_to_vmem [thread:$0]  %s24, 2048, %s26, [#allocation3], 1024, 1024, 64
    $region9: #{tpu_custom_call.1} parent=1 // pred_fallthru
      _
    // Predicated region
    $region10: #{tpu_custom_call.1} parent=1 // pred_check
      _
    $region11: #{tpu_custom_call.1} parent=1 // pred_check_branch
      %33 = sbr.rel (0) target = $region13
    $region12: #{tpu_custom_call.1} parent=1 // pred_region
      %35 = dma.done [#allocation5], 16
    $region13: #{tpu_custom_call.1} parent=1 // pred_fallthru
      _
    // Predicated region
    $region14: #{tpu_custom_call.1} parent=1 // pred_check
      _
    $region15: #{tpu_custom_call.1} parent=1 // pred_check_branch
      %37 = sbr.rel (0) target = $region17
    $region16: #{tpu_custom_call.1} parent=1 // pred_region
      %39 = dma.done [#allocation3], 2048
    $region17: #{tpu_custom_call.1} parent=1 // pred_fallthru
      _
    %40 = sfence
    %v41 = vld [vmem:[#allocation6] sm:$0xff]
    %v42 = vld [vmem:[#allocation6 + $0x8] sm:$0xff]
    %v43 = vld [vmem:[#allocation6 + $0x10] sm:$0xff]
    %v44 = vld [vmem:[#allocation6 + $0x18] sm:$0xff]
    %v45 = vld [vmem:[#allocation6 + $0x20] sm:$0xff]
    %v46 = vld [vmem:[#allocation6 + $0x28] sm:$0xff]
    %v47 = vld [vmem:[#allocation6 + $0x30] sm:$0xff]
    %v48 = vld [vmem:[#allocation6 + $0x38] sm:$0xff]
    %s49 = scalar_lea.vmem [#allocation6], 64
    %v50 = vld [vmem:[%s49] sm:$0xff]
    %v51 = vld [vmem:[%s49 + $0x8] sm:$0xff]
    %v52 = vld [vmem:[%s49 + $0x10] sm:$0xff]
    %v53 = vld [vmem:[%s49 + $0x18] sm:$0xff]
    %v54 = vld [vmem:[%s49 + $0x20] sm:$0xff]
    %v55 = vld [vmem:[%s49 + $0x28] sm:$0xff]
    %v56 = vld [vmem:[%s49 + $0x30] sm:$0xff]
    %v57 = vld [vmem:[%s49 + $0x38] sm:$0xff]
    %s58 = sld [smem:[#allocation2]]
    %s59 = sld [smem:[#allocation2 + $0x1]]
    %s60 = sld [smem:[#allocation2 + $0x2]]
    %s61 = sld [smem:[#allocation2 + $0x3]]
    %s62 = sld [smem:[#allocation2 + $0x4]]
    %s63 = sld [smem:[#allocation2 + $0x5]]
    %s64 = sld [smem:[#allocation2 + $0x6]]
    %s65 = sld [smem:[#allocation2 + $0x7]]
    %s66 = sld [smem:[#allocation2 + $0x8]]
    %v67 = vstv %s58
    %v68 = vmul.f32 %v41, %v67
    %v69 = vmul.f32 %v42, %v67
    %v70 = vmul.f32 %v43, %v67
    %v71 = vmul.f32 %v44, %v67
    %v72 = vmul.f32 %v45, %v67
    %v73 = vmul.f32 %v46, %v67
    %v74 = vmul.f32 %v47, %v67
    %v75 = vmul.f32 %v48, %v67
    %v76 = vstv %s60
    %v77 = vmul.f32 %v50, %v76
    %v78 = vmul.f32 %v51, %v76
    %v79 = vmul.f32 %v52, %v76
    %v80 = vmul.f32 %v53, %v76
    %v81 = vmul.f32 %v54, %v76
    %v82 = vmul.f32 %v55, %v76
    %v83 = vmul.f32 %v56, %v76
    %v84 = vmul.f32 %v57, %v76
    %v85 = vadd.f32 %v68, %v77
    %v86 = vadd.f32 %v69, %v78
    %v87 = vadd.f32 %v70, %v79
    %v88 = vadd.f32 %v71, %v80
    %v89 = vadd.f32 %v72, %v81
    %v90 = vadd.f32 %v73, %v82
    %v91 = vadd.f32 %v74, %v83
    %v92 = vadd.f32 %v75, %v84
    %v93 = vstv %s62
    %v94 = vadd.f32 %v85, %v93
    %v95 = vadd.f32 %v86, %v93
    %v96 = vadd.f32 %v87, %v93
    %v97 = vadd.f32 %v88, %v93
    %v98 = vadd.f32 %v89, %v93
    %v99 = vadd.f32 %v90, %v93
    %v100 = vadd.f32 %v91, %v93
    %v101 = vadd.f32 %v92, %v93
    %v102 = vmax.f32 %v94, 0.0
    %v103 = vmax.f32 %v95, 0.0
    %v104 = vmax.f32 %v96, 0.0
    %v105 = vmax.f32 %v97, 0.0
    %v106 = vmax.f32 %v98, 0.0
    %v107 = vmax.f32 %v99, 0.0
    %v108 = vmax.f32 %v100, 0.0
    %v109 = vmax.f32 %v101, 0.0
    %v110 = vstv %s59
    %v111 = vmul.f32 %v41, %v110
    %v112 = vmul.f32 %v42, %v110
    %v113 = vmul.f32 %v43, %v110
    %v114 = vmul.f32 %v44, %v110
    %v115 = vmul.f32 %v45, %v110
    %v116 = vmul.f32 %v46, %v110
    %v117 = vmul.f32 %v47, %v110
    %v118 = vmul.f32 %v48, %v110
    %v119 = vstv %s61
    %v120 = vmul.f32 %v50, %v119
    %v121 = vmul.f32 %v51, %v119
    %v122 = vmul.f32 %v52, %v119
    %v123 = vmul.f32 %v53, %v119
    %v124 = vmul.f32 %v54, %v119
    %v125 = vmul.f32 %v55, %v119
    %v126 = vmul.f32 %v56, %v119
    %v127 = vmul.f32 %v57, %v119
    %v128 = vadd.f32 %v111, %v120
    %v129 = vadd.f32 %v112, %v121
    %v130 = vadd.f32 %v113, %v122
    %v131 = vadd.f32 %v114, %v123
    %v132 = vadd.f32 %v115, %v124
    %v133 = vadd.f32 %v116, %v125
    %v134 = vadd.f32 %v117, %v126
    %v135 = vadd.f32 %v118, %v127
    %v136 = vstv %s63
    %v137 = vadd.f32 %v128, %v136
    %v138 = vadd.f32 %v129, %v136
    %v139 = vadd.f32 %v130, %v136
    %v140 = vadd.f32 %v131, %v136
    %v141 = vadd.f32 %v132, %v136
    %v142 = vadd.f32 %v133, %v136
    %v143 = vadd.f32 %v134, %v136
    %v144 = vadd.f32 %v135, %v136
    %v145 = vmax.f32 %v137, 0.0
    %v146 = vmax.f32 %v138, 0.0
    %v147 = vmax.f32 %v139, 0.0
    %v148 = vmax.f32 %v140, 0.0
    %v149 = vmax.f32 %v141, 0.0
    %v150 = vmax.f32 %v142, 0.0
    %v151 = vmax.f32 %v143, 0.0
    %v152 = vmax.f32 %v144, 0.0
    %v153 = vstv %s64
    %v154 = vmul.f32 %v102, %v153
    %v155 = vmul.f32 %v103, %v153
    %v156 = vmul.f32 %v104, %v153
    %v157 = vmul.f32 %v105, %v153
    %v158 = vmul.f32 %v106, %v153
    %v159 = vmul.f32 %v107, %v153
    %v160 = vmul.f32 %v108, %v153
    %v161 = vmul.f32 %v109, %v153
    %v162 = vstv %s65
    %v163 = vmul.f32 %v145, %v162
    %v164 = vmul.f32 %v146, %v162
    %v165 = vmul.f32 %v147, %v162
    %v166 = vmul.f32 %v148, %v162
    %v167 = vmul.f32 %v149, %v162
    %v168 = vmul.f32 %v150, %v162
    %v169 = vmul.f32 %v151, %v162
    %v170 = vmul.f32 %v152, %v162
    %v171 = vadd.f32 %v154, %v163
    %v172 = vadd.f32 %v155, %v164
    %v173 = vadd.f32 %v156, %v165
    %v174 = vadd.f32 %v157, %v166
    %v175 = vadd.f32 %v158, %v167
    %v176 = vadd.f32 %v159, %v168
    %v177 = vadd.f32 %v160, %v169
    %v178 = vadd.f32 %v161, %v170
    %v179 = vstv %s66
    %v180 = vadd.f32 %v171, %v179
    %v181 = vadd.f32 %v172, %v179
    %v182 = vadd.f32 %v173, %v179
    %v183 = vadd.f32 %v174, %v179
    %v184 = vadd.f32 %v175, %v179
    %v185 = vadd.f32 %v176, %v179
    %v186 = vadd.f32 %v177, %v179
    %v187 = vadd.f32 %v178, %v179
    %v188 = vmul.f32 %v180, 0.5
    %v189 = vmul.f32 %v181, 0.5
    %v190 = vmul.f32 %v182, 0.5
    %v191 = vmul.f32 %v183, 0.5
    %v192 = vmul.f32 %v184, 0.5
    %v193 = vmul.f32 %v185, 0.5
    %v194 = vmul.f32 %v186, 0.5
    %v195 = vmul.f32 %v187, 0.5
    %v196 = vtanh.pop %v188
    %v197 = vtanh.pop %v189
    %v198 = vtanh.pop %v190
    %v199 = vtanh.pop %v191
    %v200 = vtanh.pop %v192
    %v201 = vtanh.pop %v193
    %v202 = vtanh.pop %v194
    %v203 = vtanh.pop %v195
    %v204 = vmul.f32 %v196, 0.5
    %v205 = vmul.f32 %v197, 0.5
    %v206 = vmul.f32 %v198, 0.5
    %v207 = vmul.f32 %v199, 0.5
    %v208 = vmul.f32 %v200, 0.5
    %v209 = vmul.f32 %v201, 0.5
    %v210 = vmul.f32 %v202, 0.5
    %v211 = vmul.f32 %v203, 0.5
    %v212 = vadd.f32 %v204, 0.5
    %v213 = vadd.f32 %v205, 0.5
    %v214 = vadd.f32 %v206, 0.5
    %v215 = vadd.f32 %v207, 0.5
    %v216 = vadd.f32 %v208, 0.5
    %v217 = vadd.f32 %v209, 0.5
    %v218 = vadd.f32 %v210, 0.5
    %v219 = vadd.f32 %v211, 0.5
    %220 = vst [vmem:[#allocation7] sm:$0xff] %v212
    %221 = vst [vmem:[#allocation7 + $0x8] sm:$0xff] %v213
    %222 = vst [vmem:[#allocation7 + $0x10] sm:$0xff] %v214
    %223 = vst [vmem:[#allocation7 + $0x18] sm:$0xff] %v215
    %224 = vst [vmem:[#allocation7 + $0x20] sm:$0xff] %v216
    %225 = vst [vmem:[#allocation7 + $0x28] sm:$0xff] %v217
    %226 = vst [vmem:[#allocation7 + $0x30] sm:$0xff] %v218
    %227 = vst [vmem:[#allocation7 + $0x38] sm:$0xff] %v219
    // Predicated region
    $region18: #{tpu_custom_call.1} parent=1 // pred_check
      _
    $region19: #{tpu_custom_call.1} parent=1 // pred_check_branch
      %229 = sbr.rel (0) target = $region21
    $region20: #{tpu_custom_call.1} parent=1 // pred_region
      %231 = vsyncadd [#allocation4], 0
      %s233 = sshll.u32 [#allocation7], 4
      %s234 = int_to_ptr.vmem [resolvable:$true] %s233
      %s235 = sshll.u32 %s2, 4
      %s236 = int_to_ptr.hbm [resolvable:$true] %s235
      %238 = dma.vmem_to_hbm [thread:$0]  %s234, 1024, %s236, [#allocation4]
    $region21: #{tpu_custom_call.1} parent=1 // pred_fallthru
      _
    // Predicated region
    $region22: #{tpu_custom_call.1} parent=1 // pred_check
      _
    $region23: #{tpu_custom_call.1} parent=1 // pred_check_branch
      %240 = sbr.rel (0) target = $region25
    $region24: #{tpu_custom_call.1} parent=1 // pred_region
      %242 = dma.done [#allocation4], 1024
    $region25: #{tpu_custom_call.1} parent=1 // pred_fallthru
      _
    %243 = vsyncpa [#allocation3], 1
    %244 = vsyncpa [#allocation4], 1
    %245 = vsyncpa [#allocation5], 1

</llo_original>
